<compile_context>
chip_gen: v6e
topology: v6e:2x2x1
jax: 0.10.0
libtpu: 0.0.40
codegen_flags: <defaults>
</compile_context>

<pallas_src>
import jax
import jax.numpy as jnp
from jax.experimental import pallas as pl
from jax.experimental.pallas import tpu as pltpu

_LANES = 128
_NEG_BIG = -1e30  # finite "minus infinity" for padded class columns (avoids inf-inf NaN)


def _linear_logsoftmax_store(x_f32, wt_ref, b_ref, out_ref):
    """[TB,F] @ W^T[F,Cp] + b[1,Cp] -> log_softmax, store only the first C cols."""
    c = out_ref.shape[-1]
    logits = jnp.dot(x_f32, wt_ref[...], preferred_element_type=jnp.float32) + b_ref[...]
    mx = jnp.max(logits, axis=-1, keepdims=True)
    lse = jnp.log(jnp.sum(jnp.exp(logits - mx), axis=-1, keepdims=True)) + mx
    out_ref[...] = (logits[:, :c] - lse).astype(out_ref.dtype)


def _eachnet_eval_kernel(x_ref, wt_ref, b_ref, out_ref):
    # Eval: mask is never read, so it is never passed / DMA'd.
    _linear_logsoftmax_store(x_ref[...].astype(jnp.float32), wt_ref, b_ref, out_ref)


def _eachnet_train_kernel(x_ref, mask_ref, wt_ref, b_ref, out_ref):
    # Training: mask streamed as int8 (0/1 exact), multiply done in f32.
    x = x_ref[...].astype(jnp.float32) * mask_ref[...].astype(jnp.float32)
    _linear_logsoftmax_store(x, wt_ref, b_ref, out_ref)


def _pick_batch_tile(B):
    """Batch tile: big (amortize ~0.35us/step), multiple of 32 (int8 sublane
    packing), >=2 grid steps for B>64 (feed both v7x TensorCores), capped so
    double-buffered tiles stay tiny in VMEM on every generation."""
    if B <= 64:
        return B                      # single full block (equals full dim -> legal)
    half = ((pl.cdiv(B, 2) + 31) // 32) * 32
    return int(min(8192, max(32, half)))


def eachnet_forward(x, mask_fc, weight, bias, *, training: bool = False,
                    mask_key=None):
    """Pallas implementation of EachNet.forward.

    x:       [B, F] float32
    mask_fc: [B, F] float32 or None
    weight:  [C, F] float32 (PyTorch nn.Linear layout)
    bias:    [C]    float32
    returns (log_softmax(fc(x or x*mask)) [B, C], mask_fc [B, F])
    """
    B, F = x.shape
    C = weight.shape[0]
    Cp = max(_LANES, pl.cdiv(C, _LANES) * _LANES)   # lane-dense class dim (VMEM only)

    # Lane-dense, padded weights/bias: zero weight columns + very negative bias
    # columns -> exp() ~ 0 for pad classes; real-column log_softmax unchanged.
    wt = jnp.zeros((F, Cp), jnp.float32).at[:, :C].set(weight.T.astype(jnp.float32))
    b2 = jnp.full((1, Cp), _NEG_BIG, jnp.float32).at[0, :C].set(bias.astype(jnp.float32))

    TB = _pick_batch_tile(B)
    grid = (pl.cdiv(B, TB),)

    x_spec = pl.BlockSpec((TB, F), lambda i: (i, 0))
    m_spec = pl.BlockSpec((TB, F), lambda i: (i, 0))
    w_spec = pl.BlockSpec((F, Cp), lambda i: (0, 0))    # resident across grid
    b_spec = pl.BlockSpec((1, Cp), lambda i: (0, 0))    # resident across grid
    o_spec = pl.BlockSpec((TB, C), lambda i: (i, 0))    # true class width -> small HBM write
    out_shape = jax.ShapeDtypeStruct((B, C), x.dtype)
    cparams = pltpu.CompilerParams(dimension_semantics=("parallel",))

    if mask_fc is None:
        # Matches torch.bernoulli(0.5) semantics (mask generated even in eval).
        if mask_key is None:
            mask_key = jax.random.PRNGKey(0)
        mask_fc = jax.random.bernoulli(mask_key, 0.5, shape=x.shape).astype(x.dtype)

    if training:
        m_i8 = mask_fc.astype(jnp.int8)   # 0/1 is exact; half the bf16 bytes
        out = pl.pallas_call(
            _eachnet_train_kernel,
            out_shape=out_shape,
            grid_spec=pl.GridSpec(
                grid=grid,
                in_specs=[x_spec, m_spec, w_spec, b_spec],
                out_specs=o_spec),
            compiler_params=cparams,
        )(x, m_i8, wt, b2)
        return out, mask_fc

    # Eval: mask never touches the kernel (no wasted DMA).
    out = pl.pallas_call(
        _eachnet_eval_kernel,
        out_shape=out_shape,
        grid_spec=pl.GridSpec(
            grid=grid,
            in_specs=[x_spec, w_spec, b_spec],
            out_specs=o_spec),
        compiler_params=cparams,
    )(x, wt, b2)
    return out, mask_fc


if __name__ == "__main__":
    # Small shapes implied by the module: x is [batch, fc_len], fc maps to num_class.
    batch, fc_len, num_class = 8, 32, 8

    key = jax.random.PRNGKey(0)
    k_x, k_w, k_b, k_m, k_rng, k_x2 = jax.random.split(key, 6)

    x = jax.random.normal(k_x, (batch, fc_len), dtype=jnp.float32)

    # Deterministic nn.Linear-style init: U(-1/sqrt(fc_len), 1/sqrt(fc_len))
    bound = 1.0 / (fc_len ** 0.5)
    weight = jax.random.uniform(k_w, (num_class, fc_len), jnp.float32, -bound, bound)
    bias = jax.random.uniform(k_b, (num_class,), jnp.float32, -bound, bound)

    mask = jax.random.bernoulli(k_m, 0.5, shape=x.shape).astype(x.dtype)

    # 1) Training with an explicit mask.
    out_train, mask_ret = eachnet_forward(x, mask, weight, bias, training=True)
    # 2) Training with mask_fc=None -> Bernoulli mask drawn in the wrapper.
    out_rng, mask_rng = eachnet_forward(x, None, weight, bias,
                                        training=True, mask_key=k_rng)
    # 3) Eval with an explicit mask (mask unused in compute, not DMA'd).
    out_eval, _ = eachnet_forward(x, mask, weight, bias, training=False)
    # 4) Larger, non-tile-divisible batch exercises the multi-step / partial-block path.
    B2 = 80
    x2 = jax.random.normal(k_x2, (B2, fc_len), dtype=jnp.float32)
    out_big, _ = eachnet_forward(x2, None, weight, bias, training=False)

    jax.block_until_ready((out_train, out_rng, mask_rng, out_eval, out_big))

    # Plain-JAX reference.
    def ref(x, m, w, b, training):
        xm = x * m if training else x
        y = xm @ w.T + b
        return jax.nn.log_softmax(y, axis=1)

    assert out_train.shape == (batch, num_class)
    assert jnp.allclose(out_train, ref(x, mask, weight, bias, True), atol=1e-5)
    assert jnp.allclose(out_eval, ref(x, mask, weight, bias, False), atol=1e-5)
    assert jnp.all((mask_rng == 0.0) | (mask_rng == 1.0))
    assert jnp.allclose(out_rng, ref(x, mask_rng, weight, bias, True), atol=1e-5)
    assert out_big.shape == (B2, num_class)
    assert jnp.allclose(out_big, ref(x2, jnp.ones_like(x2), weight, bias, False), atol=1e-5)
    assert mask_ret is mask  # provided mask is returned unchanged

    print("KERNEL_OK")
</pallas_src>

<mosaic_0001>
module attributes {stable_mosaic.version = 11 : i64} {
  func.func @_eachnet_train_kernel(%arg0: i32, %arg1: memref<8x32xf32, #tpu.memory_space<vmem>>, %arg2: memref<8x32xi8, #tpu.memory_space<vmem>>, %arg3: memref<32x128xf32, #tpu.memory_space<vmem>>, %arg4: memref<1x128xf32, #tpu.memory_space<vmem>>, %arg5: memref<8x8xf32, #tpu.memory_space<vmem>>) attributes {dimension_semantics = [#tpu.dimension_semantics<parallel>], iteration_bounds = array<i64: 1>, scalar_prefetch = 0 : i64, scratch_operands = 0 : i64, tpu.core_type = #tpu.core_type<tc>, window_params = [{transform_indices = @transform_0, window_bounds = array<i64: 8, 32>}, {transform_indices = @transform_1, window_bounds = array<i64: 8, 32>}, {pipeline_mode = #tpu.pipeline_mode<synchronous>, transform_indices = @transform_2, window_bounds = array<i64: 32, 128>}, {pipeline_mode = #tpu.pipeline_mode<synchronous>, transform_indices = @transform_3, window_bounds = array<i64: 1, 128>}, {transform_indices = @transform_4, window_bounds = array<i64: 8, 8>}]} {
    %c0 = arith.constant 0 : index
    %c0_0 = arith.constant 0 : index
    %0 = vector.load %arg1[%c0, %c0_0] : memref<8x32xf32, #tpu.memory_space<vmem>>, vector<8x32xf32>
    %c0_1 = arith.constant 0 : index
    %c0_2 = arith.constant 0 : index
    %1 = vector.load %arg2[%c0_1, %c0_2] : memref<8x32xi8, #tpu.memory_space<vmem>>, vector<8x32xi8>
    %2 = arith.sitofp %1 : vector<8x32xi8> to vector<8x32xf32>
    %3 = arith.mulf %0, %2 : vector<8x32xf32>
    %c0_3 = arith.constant 0 : index
    %c0_4 = arith.constant 0 : index
    %4 = vector.load %arg3[%c0_3, %c0_4] : memref<32x128xf32, #tpu.memory_space<vmem>>, vector<32x128xf32>
    %cst = arith.constant dense<0.000000e+00> : vector<8x128xf32>
    %5 = tpu.matmul %3, %4, %cst {dimension_numbers = #tpu.dot_dimension_numbers<[1], [0], [0], [1], [0, 0, 1, 1], [], []>} : vector<8x32xf32>, vector<32x128xf32>, vector<8x128xf32> -> vector<8x128xf32>
    %c0_5 = arith.constant 0 : index
    %c0_6 = arith.constant 0 : index
    %6 = vector.load %arg4[%c0_5, %c0_6] : memref<1x128xf32, #tpu.memory_space<vmem>>, vector<1x128xf32>
    %7 = vector.broadcast %6 : vector<1x128xf32> to vector<8x128xf32>
    %8 = arith.addf %5, %7 : vector<8x128xf32>
    %cst_7 = arith.constant dense<0xFF800000> : vector<8xf32>
    %9 = vector.multi_reduction <maximumf>, %8, %cst_7 [1] : vector<8x128xf32> to vector<8xf32>
    %10 = vector.shape_cast %9 : vector<8xf32> to vector<8x1xf32>
    %11 = vector.broadcast %10 : vector<8x1xf32> to vector<8x128xf32>
    %12 = arith.subf %8, %11 : vector<8x128xf32>
    %13 = math.exp %12 : vector<8x128xf32>
    %cst_8 = arith.constant dense<0.000000e+00> : vector<8xf32>
    %14 = vector.multi_reduction <add>, %13, %cst_8 [1] : vector<8x128xf32> to vector<8xf32>
    %15 = vector.shape_cast %14 : vector<8xf32> to vector<8x1xf32>
    %16 = math.log %15 : vector<8x1xf32>
    %17 = arith.addf %16, %10 : vector<8x1xf32>
    %18 = vector.extract_strided_slice %8 {offsets = [0, 0], sizes = [8, 8], strides = [1, 1]} : vector<8x128xf32> to vector<8x8xf32>
    %19 = vector.broadcast %17 : vector<8x1xf32> to vector<8x8xf32>
    %20 = arith.subf %18, %19 : vector<8x8xf32>
    %c0_9 = arith.constant 0 : index
    %c0_10 = arith.constant 0 : index
    %21 = vector.load %arg5[%c0_9, %c0_10] : memref<8x8xf32, #tpu.memory_space<vmem>>, vector<8x8xf32>
    tpu.vector_store %arg5[%c0_9, %c0_10], %20 {strides = array<i32>} : memref<8x8xf32, #tpu.memory_space<vmem>>, vector<8x8xf32>,
    return
  }
  func.func @transform_0(%arg0: i32) -> (i32, i32) {
    %c0_i32 = arith.constant 0 : i32
    %c0_i32_0 = arith.constant 0 : i32
    return %arg0, %c0_i32 : i32, i32
  }
  func.func @transform_1(%arg0: i32) -> (i32, i32) {
    %c0_i32 = arith.constant 0 : i32
    %c0_i32_0 = arith.constant 0 : i32
    return %arg0, %c0_i32 : i32, i32
  }
  func.func @transform_2(%arg0: i32) -> (i32, i32) {
    %c0_i32 = arith.constant 0 : i32
    %c0_i32_0 = arith.constant 0 : i32
    %c0_i32_1 = arith.constant 0 : i32
    return %c0_i32, %c0_i32_0 : i32, i32
  }
  func.func @transform_3(%arg0: i32) -> (i32, i32) {
    %c0_i32 = arith.constant 0 : i32
    %c0_i32_0 = arith.constant 0 : i32
    %c0_i32_1 = arith.constant 0 : i32
    return %c0_i32, %c0_i32_0 : i32, i32
  }
  func.func @transform_4(%arg0: i32) -> (i32, i32) {
    %c0_i32 = arith.constant 0 : i32
    %c0_i32_0 = arith.constant 0 : i32
    return %arg0, %c0_i32 : i32, i32
  }
}

</mosaic_0001>

<llo_original>
// kernel: tpu_custom_call.1
$region0: #{tpu_custom_call.1}
  #allocation0 [shape = 'u32[]', space=smem, size = 0x4, offset = 0x4, fixed_abs, tag = 'smem constant byte address 0x4 - core index']
  #allocation1 [shape = 'u32[144,128]{1,0:T(1,128)}', space=vmem, size = 0x12000, scoped, tag = 'internal scratch']
  %s0 = inlined_call_operand.hbm [shape: f32[8,32], index: 0, kind: input, shape index: {}]
  %s1 = inlined_call_operand.hbm [shape: s8[8,32], index: 1, kind: input, shape index: {}]
  %s2 = inlined_call_operand.hbm [shape: f32[32,128], index: 2, kind: input, shape index: {}]
  %s3 = inlined_call_operand.vmem [shape: f32[1,128], index: 3, kind: input, shape index: {}]
  %s4 = inlined_call_operand.hbm [shape: f32[8,8], index: 4, kind: output, shape index: {}]
  %s5 = sld [smem:[#allocation0]]
  $region38: #{tpu_custom_call.1} parent=0
    _
  %s7 = ssub.s32 1, %s5
  %s8 = scalar_select 0, %s7, %s5
  $region1: #{tpu_custom_call.1} parent=0
    #allocation2 [shape = 'u8[4096]{0}', space=vmem, size = 0x1000, scoped, tag = 'input window, operand 0, single buffered']
    #allocation3 [shape = 's32[1]{0}', space=sflag, size = 0x4, scoped, tag = 'scoped memory for tpu_custom_call.1']
    #allocation4 [shape = 's32[1]{0}', space=sflag, size = 0x4, scoped, tag = 'scoped memory for tpu_custom_call.1']
    #allocation5 [shape = 'u8[1024]{0}', space=vmem, size = 0x400, scoped, tag = 'input window, operand 1, single buffered']
    #allocation6 [shape = 's32[1]{0}', space=sflag, size = 0x4, scoped, tag = 'scoped memory for tpu_custom_call.1']
    #allocation7 [shape = 'u8[16384]{0}', space=vmem, size = 0x4000, scoped, tag = 'input window, operand 2, single buffered']
    #allocation8 [shape = 'u8[4096]{0}', space=vmem, size = 0x1000, scoped, tag = 'output window, operand 0, single buffered']
    %9 = vsyncpa [#allocation3], 0
    %10 = vsyncpa [#allocation6], 0
    %11 = vsyncpa [#allocation4], 0
    // Predicated region
    $region2: #{tpu_custom_call.1} parent=1 // pred_check
      _
    $region3: #{tpu_custom_call.1} parent=1 // pred_check_branch
      %13 = sbr.rel (0) target = $region5
    $region4: #{tpu_custom_call.1} parent=1 // pred_region
      %s15 = ssub.s32 128, 128
      %16 = vsyncadd [#allocation3], %s15
      %s18 = sshll.u32 [#allocation2], 4
      %s19 = int_to_ptr.vmem [resolvable:$true] %s18
      %21 = dma.hbm_to_vmem [thread:$0]  %s0, 128, %s19, [#allocation3]
    $region5: #{tpu_custom_call.1} parent=1 // pred_fallthru
      _
    // Predicated region
    $region6: #{tpu_custom_call.1} parent=1 // pred_check
      _
    $region7: #{tpu_custom_call.1} parent=1 // pred_check_branch
      %23 = sbr.rel (0) target = $region9
    $region8: #{tpu_custom_call.1} parent=1 // pred_region
      %s25 = ssub.s32 32, 32
      %26 = vsyncadd [#allocation6], %s25
      %s28 = sshll.u32 [#allocation5], 4
      %s29 = int_to_ptr.vmem [resolvable:$true] %s28
      %31 = dma.hbm_to_vmem [thread:$0]  %s1, 32, %s29, [#allocation6]
    $region9: #{tpu_custom_call.1} parent=1 // pred_fallthru
      _
    // Predicated region
    $region10: #{tpu_custom_call.1} parent=1 // pred_check
      _
    $region11: #{tpu_custom_call.1} parent=1 // pred_check_branch
      %33 = sbr.rel (0) target = $region13
    $region12: #{tpu_custom_call.1} parent=1 // pred_region
      %s35 = ssub.s32 512, 512
      %36 = vsyncadd [#allocation6], %s35
      %s37 = sshll.u32 [#allocation7], 4
      %s38 = int_to_ptr.vmem [resolvable:$true] %s37
      %43 = dma.hbm_to_vmem [thread:$0]  %s2, 512, %s38, [#allocation6], 128, 128, 8
    $region13: #{tpu_custom_call.1} parent=1 // pred_fallthru
      _
    // Predicated region
    $region14: #{tpu_custom_call.1} parent=1 // pred_check
      _
    $region15: #{tpu_custom_call.1} parent=1 // pred_check_branch
      %45 = sbr.rel (0) target = $region17
    $region16: #{tpu_custom_call.1} parent=1 // pred_region
      _
    $region17: #{tpu_custom_call.1} parent=1 // pred_fallthru
      _
    // Predicated region
    $region18: #{tpu_custom_call.1} parent=1 // pred_check
      _
    $region19: #{tpu_custom_call.1} parent=1 // pred_check_branch
      %47 = sbr.rel (0) target = $region21
    $region20: #{tpu_custom_call.1} parent=1 // pred_region
      %48 = dma.done [#allocation3], 128
    $region21: #{tpu_custom_call.1} parent=1 // pred_fallthru
      _
    // Predicated region
    $region22: #{tpu_custom_call.1} parent=1 // pred_check
      _
    $region23: #{tpu_custom_call.1} parent=1 // pred_check_branch
      %50 = sbr.rel (0) target = $region25
    $region24: #{tpu_custom_call.1} parent=1 // pred_region
      %51 = dma.done [#allocation6], 32
    $region25: #{tpu_custom_call.1} parent=1 // pred_fallthru
      _
    // Predicated region
    $region26: #{tpu_custom_call.1} parent=1 // pred_check
      _
    $region27: #{tpu_custom_call.1} parent=1 // pred_check_branch
      %53 = sbr.rel (0) target = $region29
    $region28: #{tpu_custom_call.1} parent=1 // pred_region
      %54 = dma.done [#allocation6], 512
    $region29: #{tpu_custom_call.1} parent=1 // pred_fallthru
      _
    %v55 = vld [vmem:[#allocation2] sm:$0xff]
    %v56 = vld [vmem:[#allocation5] sm:$0x3]
    %v57 = vunpack.c.0.s8 %v56
    %v58 = vcvt.s32.f32 %v57
    %v59 = vmul.f32 %v55, %v58
    %v60 = vld [vmem:[#allocation7] sm:$0xff]
    %v61 = vld [vmem:[#allocation7 + $0x8] sm:$0xff]
    %v62 = vld [vmem:[#allocation7 + $0x10] sm:$0xff]
    %v63 = vld [vmem:[#allocation7 + $0x18] sm:$0xff]
    %v64 = vld [vmem:[%s3] sm:$0x1]
    %v66 = vlaneseq
    %v67 = vshrl.u32 %v66, 7
    %v68 = vsub.s32 0, %v67
    %v69 = vrot.slane %v64, %v68
    %vm71 = vcmask 261120
    %v73 = vsel %vm71, %v59, 0
    %75 = vmatprep.subr.mxu0 0.0
    %76 = vmatpush1.msra.mxu0 0.0
    %77 = vmatprep.subr.mxu0 0.0
    %78 = vmatpush1.msra.mxu0 0.0
    %79 = vmatprep.subr.mxu0 0.0
    %80 = vmatpush1.msra.mxu0 0.0
    %81 = vmatprep.subr.mxu0 0.0
    %82 = vmatpush1.msra.mxu0 0.0
    %83 = vmatprep.subr.mxu0 0.0
    %84 = vmatpush1.msra.mxu0 0.0
    %85 = vmatprep.subr.mxu0 0.0
    %86 = vmatpush1.msra.mxu0 0.0
    %87 = vmatprep.subr.mxu0 0.0
    %88 = vmatpush1.msra.mxu0 0.0
    %89 = vmatprep.subr.mxu0 0.0
    %90 = vmatpush1.msra.mxu0 0.0
    %91 = vmatprep.subr.mxu0 0.0
    %92 = vmatpush1.msra.mxu0 0.0
    %93 = vmatprep.subr.mxu0 0.0
    %94 = vmatpush1.msra.mxu0 0.0
    %95 = vmatprep.subr.mxu0 0.0
    %96 = vmatpush1.msra.mxu0 0.0
    %97 = vmatprep.subr.mxu0 0.0
    %98 = vmatpush1.msra.mxu0 0.0
    %99 = vmatprep.subr.mxu0 0.0
    %100 = vmatpush1.msra.mxu0 %v63
    %101 = vmatprep.subr.mxu0 0.0
    %102 = vmatpush1.msra.mxu0 %v62
    %103 = vmatprep.subr.mxu0 0.0
    %104 = vmatpush1.msra.mxu0 %v61
    %105 = vmatprep.subr.mxu0 0.0
    %106 = vmatpush1.msra.mxu0 %v60
    %107 = vmatprep.subr.mxu0 0.0
    %108 = vmatpush2.msra.mxu0 0.0
    %109 = vmatprep.subr.mxu0 0.0
    %110 = vmatpush2.msra.mxu0 0.0
    %111 = vmatprep.subr.mxu0 0.0
    %112 = vmatpush2.msra.mxu0 0.0
    %113 = vmatprep.subr.mxu0 0.0
    %114 = vmatpush2.msra.mxu0 0.0
    %115 = vmatprep.subr.mxu0 0.0
    %116 = vmatpush2.msra.mxu0 0.0
    %117 = vmatprep.subr.mxu0 0.0
    %118 = vmatpush2.msra.mxu0 0.0
    %119 = vmatprep.subr.mxu0 0.0
    %120 = vmatpush2.msra.mxu0 0.0
    %121 = vmatprep.subr.mxu0 0.0
    %122 = vmatpush2.msra.mxu0 0.0
    %123 = vmatprep.subr.mxu0 0.0
    %124 = vmatpush2.msra.mxu0 0.0
    %125 = vmatprep.subr.mxu0 0.0
    %126 = vmatpush2.msra.mxu0 0.0
    %127 = vmatprep.subr.mxu0 0.0
    %128 = vmatpush2.msra.mxu0 0.0
    %129 = vmatprep.subr.mxu0 0.0
    %130 = vmatpush2.msra.mxu0 0.0
    %131 = vmatprep.subr.mxu0 0.0
    %132 = vmatpush2.msra.mxu0 0.0
    %133 = vmatprep.subr.mxu0 0.0
    %134 = vmatpush2.msra.mxu0 0.0
    %135 = vmatprep.subr.mxu0 0.0
    %136 = vmatpush2.msra.mxu0 0.0
    %137 = vmatprep.subr.mxu0 0.0
    %138 = vmatpush2.msra.mxu0 0.0
    %139 = vmatprep.mubr.f32.mxu0 0.0
    %140 = vmatmul.mubr.f32.gmra.mxu0 %v73
    %v141 = vpop.f32.mrf.mxu0
    %v142 = vadd.f32 %v69, %v141
    %v143 = vpop.f32.mrf.mxu0
    %144 = vdwg.mxu0
    %145 = vmax.xlane.f32.xlu0 %v142
    %v146 = vpop.xlane.xlu0 %145
    %v147 = vsub.f32 %v142, %v146
    %v148 = vmul.f32 %v147, 1.442695
    %v149 = vpow.pop %v148
    %150 = vadd.xlane.f32.xlu0 %v149
    %v151 = vpop.xlane.xlu0 %150
    %v152 = vlog2.pop %v151
    %v153 = vmul.f32 %v152, 0.6931472
    %v154 = vadd.f32 %v153, %v146
    %v155 = vsub.f32 %v142, %v154
    %vm156 = vcmask 64512
    %157 = vst.msk [vmem:[#allocation8] sm:$0xff] %vm156, %v155
    // Predicated region
    $region30: #{tpu_custom_call.1} parent=1 // pred_check
      _
    $region31: #{tpu_custom_call.1} parent=1 // pred_check_branch
      %159 = sbr.rel (0) target = $region33
    $region32: #{tpu_custom_call.1} parent=1 // pred_region
      %s161 = ssub.s32 128, 128
      %162 = vsyncadd [#allocation4], %s161
      %s164 = sshll.u32 [#allocation8], 4
      %s165 = int_to_ptr.vmem [resolvable:$true] %s164
      %167 = dma.vmem_to_hbm [thread:$0]  %s165, 128, %s4, [#allocation4]
    $region33: #{tpu_custom_call.1} parent=1 // pred_fallthru
      _
    // Predicated region
    $region34: #{tpu_custom_call.1} parent=1 // pred_check
      _
    $region35: #{tpu_custom_call.1} parent=1 // pred_check_branch
      %169 = sbr.rel (0) target = $region37
    $region36: #{tpu_custom_call.1} parent=1 // pred_region
      %170 = dma.done [#allocation4], 128
    $region37: #{tpu_custom_call.1} parent=1 // pred_fallthru
      _
    %171 = vsyncpa [#allocation3], 1
    %172 = vsyncpa [#allocation6], 1
    %173 = vsyncpa [#allocation4], 1

</llo_original>
